<compile_context>
chip_gen: v7x
topology: tpu7x:2x2x1
jax: 0.10.0
libtpu: 0.0.40
codegen_flags: <defaults>
</compile_context>

<pallas_src>
import jax
import jax.numpy as jnp
from jax.experimental import pallas as pl
from jax.experimental.pallas import tpu as pltpu


def _round_up(x, m):
    return ((x + m - 1) // m) * m


def _vmem_tile_bytes(tm, cp, itemsize):
    """Rough VMEM footprint of one pipelined grid step (double-buffered I/O)."""
    act = 2 * (2 * tm * cp * itemsize)       # x tile + out tile, double-buffered
    wts = 2 * (2 * cp * cp * itemsize)       # w1 + w2, double-buffered
    bias = 2 * (2 * cp * 4)                  # b1 + b2 (f32), double-buffered
    interm = 2 * tm * cp * 4                 # f32 h / y intermediates
    return act + wts + bias + interm


def _ffn_kernel(x_ref, w1_ref, b1_ref, w2_ref, b2_ref, o_ref):
    # x_ref: (TM, Cp) tile of tokens; w1/w2: full (Cp, Cp); b1/b2: (1, Cp) f32.
    x = x_ref[...]                                          # native dtype (f32 / bf16)
    h = jnp.dot(x, w1_ref[...], preferred_element_type=jnp.float32)
    h = jnp.maximum(h + b1_ref[...], 0.0)                   # bias + ReLU in f32
    # Second matmul: feed operands in the weight dtype (bf16 stays bf16 on MXU),
    # accumulate in f32.
    y = jnp.dot(h.astype(w2_ref.dtype), w2_ref[...],
                preferred_element_type=jnp.float32)
    # TODO(synk): dropout1/dropout2 are identity (inference mode); training-mode
    # dropout would use pltpu.prng_random_bits masking.
    y = y + b2_ref[...] + x.astype(jnp.float32)             # bias + residual in f32
    o_ref[...] = y.astype(o_ref.dtype)


def pointwise_feedforward(inputs, w1, b1, w2, b2, *, tm=None):
    """inputs: (N, L, C); w1, w2: (C_out, C_in, 1) conv1d weights; b1, b2: (C,)."""
    N, L, C = inputs.shape
    NL = N * L
    x = inputs.reshape(NL, C)

    # Conv1d(kernel_size=1): out[:, o] = sum_i W[o, i, 0] * x[:, i] + b[o]
    # Pre-transpose weights to (in_ch, out_ch) and keep them in the input dtype
    # so bf16 inputs get bf16 MXU matmuls; biases live in f32 for the epilogue.
    w1t = jnp.transpose(w1[:, :, 0]).astype(inputs.dtype)
    w2t = jnp.transpose(w2[:, :, 0]).astype(inputs.dtype)
    b1r = b1.astype(jnp.float32).reshape(1, C)
    b2r = b2.astype(jnp.float32).reshape(1, C)

    # Lane-dense channel layout: pad C up to a multiple of 128.
    Cp = _round_up(C, 128)

    itemsize = jnp.dtype(inputs.dtype).itemsize
    min_tm = 8 if itemsize >= 4 else (16 if itemsize == 2 else 32)

    if tm is None:
        tm = 512
        # Don't pad a tiny token count up to a huge tile, and keep >= 2 grid
        # steps when possible so the parallel axis can shard across v7x's 2 TCs.
        while tm > min_tm and pl.cdiv(NL, tm) < 2:
            tm //= 2
        # Respect a ~48 MiB VMEM tile budget (v7x has only 64 MiB physical).
        while tm > min_tm and _vmem_tile_bytes(tm, Cp, itemsize) > 48 * 1024 * 1024:
            tm //= 2
    tm = max(min_tm, _round_up(tm, min_tm))

    NLp = _round_up(NL, tm)

    if NLp != NL or Cp != C:
        x = jnp.pad(x, ((0, NLp - NL), (0, Cp - C)))
    if Cp != C:
        w1t = jnp.pad(w1t, ((0, Cp - C), (0, Cp - C)))
        w2t = jnp.pad(w2t, ((0, Cp - C), (0, Cp - C)))
        b1r = jnp.pad(b1r, ((0, 0), (0, Cp - C)))
        b2r = jnp.pad(b2r, ((0, 0), (0, Cp - C)))

    out = pl.pallas_call(
        _ffn_kernel,
        out_shape=jax.ShapeDtypeStruct((NLp, Cp), inputs.dtype),
        grid=(NLp // tm,),
        in_specs=[
            pl.BlockSpec((tm, Cp), lambda i: (i, 0)),   # x tile
            pl.BlockSpec((Cp, Cp), lambda i: (0, 0)),   # w1 (resident)
            pl.BlockSpec((1, Cp), lambda i: (0, 0)),    # b1 (resident)
            pl.BlockSpec((Cp, Cp), lambda i: (0, 0)),   # w2 (resident)
            pl.BlockSpec((1, Cp), lambda i: (0, 0)),    # b2 (resident)
        ],
        out_specs=pl.BlockSpec((tm, Cp), lambda i: (i, 0)),
        compiler_params=pltpu.CompilerParams(
            dimension_semantics=("parallel",),
            vmem_limit_bytes=64 * 1024 * 1024,
        ),
    )(x, w1t, b1r, w2t, b2r)

    return out[:NL, :C].reshape(N, L, C)


if __name__ == "__main__":
    # Small shapes consistent with the module: batch=2, seq=8, hidden=32.
    N, L, C = 2, 8, 32
    key = jax.random.PRNGKey(0)
    k_x, k_w1, k_b1, k_w2, k_b2 = jax.random.split(key, 5)

    x = jax.random.normal(k_x, (N, L, C), dtype=jnp.float32)
    # Conv1d parameter shapes: weight (out_ch, in_ch, kernel=1), bias (out_ch,)
    w1 = jax.random.normal(k_w1, (C, C, 1), dtype=jnp.float32) * 0.1
    b1 = jax.random.normal(k_b1, (C,), dtype=jnp.float32) * 0.1
    w2 = jax.random.normal(k_w2, (C, C, 1), dtype=jnp.float32) * 0.1
    b2 = jax.random.normal(k_b2, (C,), dtype=jnp.float32) * 0.1

    out = pointwise_feedforward(x, w1, b1, w2, b2)
    jax.block_until_ready(out)

    # Pure-JAX reference check (same math, no Pallas).
    h_ref = jnp.maximum(jnp.einsum("nlc,oc->nlo", x, w1[:, :, 0]) + b1, 0.0)
    y_ref = jnp.einsum("nlc,oc->nlo", h_ref, w2[:, :, 0]) + b2 + x
    assert jnp.allclose(out, y_ref, atol=1e-5, rtol=1e-5), "mismatch vs reference"

    print("KERNEL_OK")
</pallas_src>

<mosaic_0001>
module attributes {stable_mosaic.version = 11 : i64} {
  func.func @_ffn_kernel(%arg0: i32, %arg1: memref<8x128xf32, #tpu.memory_space<vmem>>, %arg2: memref<128x128xf32, #tpu.memory_space<vmem>>, %arg3: memref<1x128xf32, #tpu.memory_space<vmem>>, %arg4: memref<128x128xf32, #tpu.memory_space<vmem>>, %arg5: memref<1x128xf32, #tpu.memory_space<vmem>>, %arg6: memref<8x128xf32, #tpu.memory_space<vmem>>) attributes {dimension_semantics = [#tpu.dimension_semantics<parallel>], iteration_bounds = array<i64: 2>, scalar_prefetch = 0 : i64, scratch_operands = 0 : i64, tpu.core_type = #tpu.core_type<tc>, window_params = [{transform_indices = @transform_0, window_bounds = array<i64: 8, 128>}, {pipeline_mode = #tpu.pipeline_mode<synchronous>, transform_indices = @transform_1, window_bounds = array<i64: 128, 128>}, {pipeline_mode = #tpu.pipeline_mode<synchronous>, transform_indices = @transform_2, window_bounds = array<i64: 1, 128>}, {pipeline_mode = #tpu.pipeline_mode<synchronous>, transform_indices = @transform_3, window_bounds = array<i64: 128, 128>}, {pipeline_mode = #tpu.pipeline_mode<synchronous>, transform_indices = @transform_4, window_bounds = array<i64: 1, 128>}, {transform_indices = @transform_5, window_bounds = array<i64: 8, 128>}]} {
    %c0 = arith.constant 0 : index
    %c0_0 = arith.constant 0 : index
    %0 = vector.load %arg1[%c0, %c0_0] : memref<8x128xf32, #tpu.memory_space<vmem>>, vector<8x128xf32>
    %c0_1 = arith.constant 0 : index
    %c0_2 = arith.constant 0 : index
    %1 = vector.load %arg2[%c0_1, %c0_2] : memref<128x128xf32, #tpu.memory_space<vmem>>, vector<128x128xf32>
    %cst = arith.constant dense<0.000000e+00> : vector<8x128xf32>
    %2 = tpu.matmul %0, %1, %cst {dimension_numbers = #tpu.dot_dimension_numbers<[1], [0], [0], [1], [0, 0, 1, 1], [], []>} : vector<8x128xf32>, vector<128x128xf32>, vector<8x128xf32> -> vector<8x128xf32>
    %c0_3 = arith.constant 0 : index
    %c0_4 = arith.constant 0 : index
    %3 = vector.load %arg3[%c0_3, %c0_4] : memref<1x128xf32, #tpu.memory_space<vmem>>, vector<1x128xf32>
    %4 = vector.broadcast %3 : vector<1x128xf32> to vector<8x128xf32>
    %5 = arith.addf %2, %4 : vector<8x128xf32>
    %cst_5 = arith.constant 0.000000e+00 : f32
    %6 = vector.broadcast %cst_5 : f32 to vector<8x128xf32>
    %7 = arith.maximumf %5, %6 : vector<8x128xf32>
    %c0_6 = arith.constant 0 : index
    %c0_7 = arith.constant 0 : index
    %8 = vector.load %arg4[%c0_6, %c0_7] : memref<128x128xf32, #tpu.memory_space<vmem>>, vector<128x128xf32>
    %cst_8 = arith.constant dense<0.000000e+00> : vector<8x128xf32>
    %9 = tpu.matmul %7, %8, %cst_8 {dimension_numbers = #tpu.dot_dimension_numbers<[1], [0], [0], [1], [0, 0, 1, 1], [], []>} : vector<8x128xf32>, vector<128x128xf32>, vector<8x128xf32> -> vector<8x128xf32>
    %c0_9 = arith.constant 0 : index
    %c0_10 = arith.constant 0 : index
    %10 = vector.load %arg5[%c0_9, %c0_10] : memref<1x128xf32, #tpu.memory_space<vmem>>, vector<1x128xf32>
    %11 = vector.broadcast %10 : vector<1x128xf32> to vector<8x128xf32>
    %12 = arith.addf %9, %11 : vector<8x128xf32>
    %13 = arith.addf %12, %0 : vector<8x128xf32>
    %c0_11 = arith.constant 0 : index
    %c0_12 = arith.constant 0 : index
    %14 = vector.load %arg6[%c0_11, %c0_12] : memref<8x128xf32, #tpu.memory_space<vmem>>, vector<8x128xf32>
    tpu.vector_store %arg6[%c0_11, %c0_12], %13 {strides = array<i32>} : memref<8x128xf32, #tpu.memory_space<vmem>>, vector<8x128xf32>,
    return
  }
  func.func @transform_0(%arg0: i32) -> (i32, i32) {
    %c0_i32 = arith.constant 0 : i32
    %c0_i32_0 = arith.constant 0 : i32
    return %arg0, %c0_i32 : i32, i32
  }
  func.func @transform_1(%arg0: i32) -> (i32, i32) {
    %c0_i32 = arith.constant 0 : i32
    %c0_i32_0 = arith.constant 0 : i32
    %c0_i32_1 = arith.constant 0 : i32
    return %c0_i32, %c0_i32_0 : i32, i32
  }
  func.func @transform_2(%arg0: i32) -> (i32, i32) {
    %c0_i32 = arith.constant 0 : i32
    %c0_i32_0 = arith.constant 0 : i32
    %c0_i32_1 = arith.constant 0 : i32
    return %c0_i32, %c0_i32_0 : i32, i32
  }
  func.func @transform_3(%arg0: i32) -> (i32, i32) {
    %c0_i32 = arith.constant 0 : i32
    %c0_i32_0 = arith.constant 0 : i32
    %c0_i32_1 = arith.constant 0 : i32
    return %c0_i32, %c0_i32_0 : i32, i32
  }
  func.func @transform_4(%arg0: i32) -> (i32, i32) {
    %c0_i32 = arith.constant 0 : i32
    %c0_i32_0 = arith.constant 0 : i32
    %c0_i32_1 = arith.constant 0 : i32
    return %c0_i32, %c0_i32_0 : i32, i32
  }
  func.func @transform_5(%arg0: i32) -> (i32, i32) {
    %c0_i32 = arith.constant 0 : i32
    %c0_i32_0 = arith.constant 0 : i32
    return %arg0, %c0_i32 : i32, i32
  }
}

</mosaic_0001>

<llo_original>
// kernel: tpu_custom_call.1
$region0: #{tpu_custom_call.1}
  #allocation0 [shape = 'u32[]', space=smem, size = 0x4, offset = 0x4, fixed_abs, tag = 'smem constant byte address 0x4 - core index']
  #allocation1 [shape = 'u32[144,128]{1,0:T(1,128)}', space=vmem, size = 0x12000, scoped, tag = 'internal scratch']
  %s0 = inlined_call_operand.hbm [shape: f32[16,128], index: 0, kind: input, shape index: {}]
  %s1 = inlined_call_operand.hbm [shape: f32[128,128], index: 1, kind: input, shape index: {}]
  %s2 = inlined_call_operand.hbm [shape: f32[1,128], index: 2, kind: input, shape index: {}]
  %s3 = inlined_call_operand.hbm [shape: f32[128,128], index: 3, kind: input, shape index: {}]
  %s4 = inlined_call_operand.hbm [shape: f32[1,128], index: 4, kind: input, shape index: {}]
  %s5 = inlined_call_operand.hbm [shape: f32[16,128], index: 5, kind: output, shape index: {}]
  %s6 = sld [smem:[#allocation0]]
  $region73: #{tpu_custom_call.1} parent=0
    _
  %s8 = ssub.s32 1, %s6
  %s9 = scalar_select 0, %s8, %s6
  $region1: #{tpu_custom_call.1} parent=0
    #allocation2 [shape = 'u8[8192]{0}', space=vmem, size = 0x2000, scoped, tag = 'input window, operand 0']
    #allocation3 [shape = 's32[2]{0}', space=sflag, size = 0x8, scoped, tag = 'scoped memory for tpu_custom_call.1']
    #allocation4 [shape = 's32[2]{0}', space=sflag, size = 0x8, scoped, tag = 'scoped memory for tpu_custom_call.1']
    #allocation5 [shape = 'u8[65536]{0}', space=vmem, size = 0x10000, scoped, tag = 'input window, operand 1, single buffered']
    #allocation6 [shape = 's32[1]{0}', space=sflag, size = 0x4, scoped, tag = 'scoped memory for tpu_custom_call.1']
    #allocation7 [shape = 'u8[512]{0}', space=vmem, size = 0x400, scoped, tag = 'input window, operand 2, single buffered']
    #allocation8 [shape = 'u8[65536]{0}', space=vmem, size = 0x10000, scoped, tag = 'input window, operand 3, single buffered']
    #allocation9 [shape = 's32[1]{0}', space=sflag, size = 0x4, scoped, tag = 'scoped memory for tpu_custom_call.1']
    #allocation10 [shape = 'u8[512]{0}', space=vmem, size = 0x400, scoped, tag = 'input window, operand 4, single buffered']
    #allocation11 [shape = 'u8[8192]{0}', space=vmem, size = 0x2000, scoped, tag = 'output window, operand 0']
    %10 = vsyncpa [#allocation3], 0
    %s11 = scalar_lea.sflag [#allocation3], 1
    %12 = vsyncpa %s11, 0
    %13 = vsyncpa [#allocation6], 0
    %14 = vsyncpa [#allocation9], 0
    %15 = vsyncpa [#allocation4], 0
    %s16 = scalar_lea.sflag [#allocation4], 1
    %17 = vsyncpa %s16, 0
    loop: start=0, step=1, limit=4
    $region2: #{tpu_custom_call.1} parent=1 // loop_pre_header
      _
    $region3: #{tpu_custom_call.1} parent=1 // loop_header
      %s19 = sphi 0, %s23
      %p20 = scmp.ge.s32.totalorder %s19, 4
      %s29 = sphi 0, %s31
      %s32 = sphi 0, %s29
      %s33 = sphi 0, %s32
      %s49 = sphi 0, %s33
      %s53 = sphi 0, %s53
      %s55 = sphi 0, %s53
      %s56 = sphi 0, %s55
      %s70 = sphi 0, %s56
      %s74 = sphi 0, %s74
      %s76 = sphi 0, %s74
      %s77 = sphi 0, %s76
      %s91 = sphi 0, %s77
      %s95 = sphi 0, %s95
      %s97 = sphi 0, %s95
      %s98 = sphi 0, %s97
      %s112 = sphi 0, %s98
      %s116 = sphi 0, %s116
      %s118 = sphi 0, %s116
      %s119 = sphi 0, %s118
      %s133 = sphi 0, %s119
      %s139 = sphi 0, %s141
      %s142 = sphi 0, %s139
      %s143 = sphi 0, %s142
      %s159 = sphi 0, %s143
    $region4: #{tpu_custom_call.1} parent=1 // loop_header_branch
      %22 = sbr.rel (%p20) target = $region8
    $region5: #{tpu_custom_call.1} parent=1 // loop_body
      %s24 = ssub.s32 %s19, 1
      %s25 = ssub.s32 %s19, 2
      %s26 = sadd.s32 %s19, 1
      %s27 = ssub.s32 %s19, %s26
      %p28 = scmp.eq.s32.totalorder %s27, 0
      %s30 = sadd.s32 %s29, 1
      %s31 = scalar_select %p28, %s29, %s30
      %p34 = pneg %p28
      %p35 = scmp.eq.s32.totalorder %s19, 1
      %p36 = por %p34, %p35
      %p37 = scmp.ne.s32.totalorder %s29, %s32
      %p38 = scmp.eq.s32.totalorder %s19, 0
      %p39 = por %p37, %p38
      %p40 = scmp.ne.s32.totalorder %s29, %s32
      %p41 = scmp.eq.s32.totalorder %s24, 1
      %p42 = por %p40, %p41
      %p43 = scmp.ne.s32.totalorder %s32, %s33
      %p44 = scmp.eq.s32.totalorder %s24, 0
      %p45 = por %p43, %p44
      %p46 = scmp.ne.s32.totalorder %s32, %s33
      %p47 = scmp.eq.s32.totalorder %s25, 1
      %p48 = por %p46, %p47
      %p50 = scmp.ne.s32.totalorder %s33, %s49
      %p51 = scmp.eq.s32.totalorder %s25, 0
      %p52 = por %p50, %p51
      %s54 = sadd.s32 %s53, 1
      %p57 = scmp.eq.s32.totalorder %s19, 1
      %p58 = scmp.ne.s32.totalorder %s53, %s55
      %p59 = scmp.eq.s32.totalorder %s19, 0
      %p60 = por %p58, %p59
      %p61 = scmp.ne.s32.totalorder %s53, %s55
      %p62 = scmp.eq.s32.totalorder %s24, 1
      %p63 = por %p61, %p62
      %p64 = scmp.ne.s32.totalorder %s55, %s56
      %p65 = scmp.eq.s32.totalorder %s24, 0
      %p66 = por %p64, %p65
      %p67 = scmp.ne.s32.totalorder %s55, %s56
      %p68 = scmp.eq.s32.totalorder %s25, 1
      %p69 = por %p67, %p68
      %p71 = scmp.ne.s32.totalorder %s56, %s70
      %p72 = scmp.eq.s32.totalorder %s25, 0
      %p73 = por %p71, %p72
      %s75 = sadd.s32 %s74, 1
      %p78 = scmp.eq.s32.totalorder %s19, 1
      %p79 = scmp.ne.s32.totalorder %s74, %s76
      %p80 = scmp.eq.s32.totalorder %s19, 0
      %p81 = por %p79, %p80
      %p82 = scmp.ne.s32.totalorder %s74, %s76
      %p83 = scmp.eq.s32.totalorder %s24, 1
      %p84 = por %p82, %p83
      %p85 = scmp.ne.s32.totalorder %s76, %s77
      %p86 = scmp.eq.s32.totalorder %s24, 0
      %p87 = por %p85, %p86
      %p88 = scmp.ne.s32.totalorder %s76, %s77
      %p89 = scmp.eq.s32.totalorder %s25, 1
      %p90 = por %p88, %p89
      %p92 = scmp.ne.s32.totalorder %s77, %s91
      %p93 = scmp.eq.s32.totalorder %s25, 0
      %p94 = por %p92, %p93
      %s96 = sadd.s32 %s95, 1
      %p99 = scmp.eq.s32.totalorder %s19, 1
      %p100 = scmp.ne.s32.totalorder %s95, %s97
      %p101 = scmp.eq.s32.totalorder %s19, 0
      %p102 = por %p100, %p101
      %p103 = scmp.ne.s32.totalorder %s95, %s97
      %p104 = scmp.eq.s32.totalorder %s24, 1
      %p105 = por %p103, %p104
      %p106 = scmp.ne.s32.totalorder %s97, %s98
      %p107 = scmp.eq.s32.totalorder %s24, 0
      %p108 = por %p106, %p107
      %p109 = scmp.ne.s32.totalorder %s97, %s98
      %p110 = scmp.eq.s32.totalorder %s25, 1
      %p111 = por %p109, %p110
      %p113 = scmp.ne.s32.totalorder %s98, %s112
      %p114 = scmp.eq.s32.totalorder %s25, 0
      %p115 = por %p113, %p114
      %s117 = sadd.s32 %s116, 1
      %p120 = scmp.eq.s32.totalorder %s19, 1
      %p121 = scmp.ne.s32.totalorder %s116, %s118
      %p122 = scmp.eq.s32.totalorder %s19, 0
      %p123 = por %p121, %p122
      %p124 = scmp.ne.s32.totalorder %s116, %s118
      %p125 = scmp.eq.s32.totalorder %s24, 1
      %p126 = por %p124, %p125
      %p127 = scmp.ne.s32.totalorder %s118, %s119
      %p128 = scmp.eq.s32.totalorder %s24, 0
      %p129 = por %p127, %p128
      %p130 = scmp.ne.s32.totalorder %s118, %s119
      %p131 = scmp.eq.s32.totalorder %s25, 1
      %p132 = por %p130, %p131
      %p134 = scmp.ne.s32.totalorder %s119, %s133
      %p135 = scmp.eq.s32.totalorder %s25, 0
      %p136 = por %p134, %p135
      %s137 = ssub.s32 %s19, %s26
      %p138 = scmp.eq.s32.totalorder %s137, 0
      %s140 = sadd.s32 %s139, 1
      %s141 = scalar_select %p138, %s139, %s140
      %p144 = pneg %p138
      %p145 = scmp.eq.s32.totalorder %s19, 1
      %p146 = por %p144, %p145
      %p147 = scmp.ne.s32.totalorder %s139, %s142
      %p148 = scmp.eq.s32.totalorder %s19, 0
      %p149 = por %p147, %p148
      %p150 = scmp.ne.s32.totalorder %s139, %s142
      %p151 = scmp.eq.s32.totalorder %s24, 1
      %p152 = por %p150, %p151
      %p153 = scmp.ne.s32.totalorder %s142, %s143
      %p154 = scmp.eq.s32.totalorder %s24, 0
      %p155 = por %p153, %p154
      %p156 = scmp.ne.s32.totalorder %s142, %s143
      %p157 = scmp.eq.s32.totalorder %s25, 1
      %p158 = por %p156, %p157
      %p160 = scmp.ne.s32.totalorder %s143, %s159
      %p161 = scmp.eq.s32.totalorder %s25, 0
      %p162 = por %p160, %p161
      %p163 = scmp.le.s32.totalorder 1, %s19
      %p164 = scmp.lt.s32.totalorder %s19, 3
      %p165 = pnand %p163, %p164
      %p166 = pneg %p165
      // Predicated region
      $region9: #{tpu_custom_call.1} parent=5 // pred_check
        _
      $region10: #{tpu_custom_call.1} parent=5 // pred_check_branch
        %168 = sbr.rel (%p165) target = $region12
      $region11: #{tpu_custom_call.1} parent=5 // pred_region
        %s169 = ssub.s32 %s19, 1
        // Predicated region
        $region13: #{tpu_custom_call.1} parent=11 // pred_check
          %p170 = pneg %p66
        $region14: #{tpu_custom_call.1} parent=11 // pred_check_branch
          %172 = sbr.rel (%p170) target = $region16
        $region15: #{tpu_custom_call.1} parent=11 // pred_region
          %s174 = ssub.s32 2048, 2048
          %175 = vsyncadd [#allocation6], %s174
          %s176 = sshll.u32 [#allocation5], 4
          %s177 = int_to_ptr.vmem [resolvable:$true] %s176
          %182 = dma.hbm_to_vmem [thread:$0]  %s1, 2048, %s177, [#allocation6], 128, 128, 8
        $region16: #{tpu_custom_call.1} parent=11 // pred_fallthru
          _
        // Predicated region
        $region17: #{tpu_custom_call.1} parent=11 // pred_check
          %p183 = pneg %p87
        $region18: #{tpu_custom_call.1} parent=11 // pred_check_branch
          %185 = sbr.rel (%p183) target = $region20
        $region19: #{tpu_custom_call.1} parent=11 // pred_region
          %s187 = ssub.s32 16, 16
          %188 = vsyncadd [#allocation6], %s187
          %s190 = sshll.u32 [#allocation7], 4
          %s191 = int_to_ptr.vmem [resolvable:$true] %s190
          %193 = dma.hbm_to_vmem [thread:$0]  %s2, 16, %s191, [#allocation6]
        $region20: #{tpu_custom_call.1} parent=11 // pred_fallthru
          _
        // Predicated region
        $region21: #{tpu_custom_call.1} parent=11 // pred_check
          %p194 = pneg %p108
        $region22: #{tpu_custom_call.1} parent=11 // pred_check_branch
          %196 = sbr.rel (%p194) target = $region24
        $region23: #{tpu_custom_call.1} parent=11 // pred_region
          %s198 = ssub.s32 2048, 2048
          %199 = vsyncadd [#allocation9], %s198
          %s200 = sshll.u32 [#allocation8], 4
          %s201 = int_to_ptr.vmem [resolvable:$true] %s200
          %206 = dma.hbm_to_vmem [thread:$0]  %s3, 2048, %s201, [#allocation9], 128, 128, 8
        $region24: #{tpu_custom_call.1} parent=11 // pred_fallthru
          _
        // Predicated region
        $region25: #{tpu_custom_call.1} parent=11 // pred_check
          %p207 = pneg %p129
        $region26: #{tpu_custom_call.1} parent=11 // pred_check_branch
          %209 = sbr.rel (%p207) target = $region28
        $region27: #{tpu_custom_call.1} parent=11 // pred_region
          %s211 = ssub.s32 16, 16
          %212 = vsyncadd [#allocation9], %s211
          %s214 = sshll.u32 [#allocation10], 4
          %s215 = int_to_ptr.vmem [resolvable:$true] %s214
          %217 = dma.hbm_to_vmem [thread:$0]  %s4, 16, %s215, [#allocation9]
        $region28: #{tpu_custom_call.1} parent=11 // pred_fallthru
          _
      $region12: #{tpu_custom_call.1} parent=5 // pred_fallthru
        _
      %p218 = scmp.lt.s32.totalorder %s19, 2
      // Predicated region
      $region29: #{tpu_custom_call.1} parent=5 // pred_check
        %p219 = pneg %p218
      $region30: #{tpu_custom_call.1} parent=5 // pred_check_branch
        %221 = sbr.rel (%p219) target = $region32
      $region31: #{tpu_custom_call.1} parent=5 // pred_region
        // Predicated region
        $region33: #{tpu_custom_call.1} parent=31 // pred_check
          %p222 = pneg %p39
        $region34: #{tpu_custom_call.1} parent=31 // pred_check_branch
          %224 = sbr.rel (%p222) target = $region36
        $region35: #{tpu_custom_call.1} parent=31 // pred_region
          %s225 = sand.u32 %s29, 1
          %s226 = scalar_lea.sflag [#allocation3], %s225
          %s227 = sand.u32 %s29, 1
          %s228 = smul.addr %s227, 8
          %s229 = scalar_lea.vmem [#allocation2], %s228
          %s231 = ssub.s32 128, 128
          %232 = vsyncadd %s226, %s231
          %s233 = smul.addr %s19, 128
          %s234 = scalar_lea.hbm %s0, %s233
          %s236 = sshll.u32 %s229, 4
          %s237 = int_to_ptr.vmem [resolvable:$true] %s236
          %239 = dma.hbm_to_vmem [thread:$0]  %s234, 128, %s237, %s226
        $region36: #{tpu_custom_call.1} parent=31 // pred_fallthru
          _
      $region32: #{tpu_custom_call.1} parent=5 // pred_fallthru
        _
      %p240 = scmp.le.s32.totalorder 1, %s19
      %p241 = scmp.lt.s32.totalorder %s19, 3
      %p242 = pnand %p240, %p241
      %p243 = pneg %p242
      // Predicated region
      $region37: #{tpu_custom_call.1} parent=5 // pred_check
        _
      $region38: #{tpu_custom_call.1} parent=5 // pred_check_branch
        %245 = sbr.rel (%p242) target = $region40
      $region39: #{tpu_custom_call.1} parent=5 // pred_region
        %s246 = ssub.s32 %s19, 1
        %s247 = sand.u32 %s32, 1
        %s248 = scalar_lea.sflag [#allocation3], %s247
        %s249 = sand.u32 %s32, 1
        %s250 = smul.addr %s249, 8
        %s251 = scalar_lea.vmem [#allocation2], %s250
        // Predicated region
        $region41: #{tpu_custom_call.1} parent=39 // pred_check
          %p252 = pneg %p45
        $region42: #{tpu_custom_call.1} parent=39 // pred_check_branch
          %254 = sbr.rel (%p252) target = $region44
        $region43: #{tpu_custom_call.1} parent=39 // pred_region
          %255 = dma.done %s248, 128
        $region44: #{tpu_custom_call.1} parent=39 // pred_fallthru
          _
        // Predicated region
        $region45: #{tpu_custom_call.1} parent=39 // pred_check
          %p256 = pneg %p66
        $region46: #{tpu_custom_call.1} parent=39 // pred_check_branch
          %258 = sbr.rel (%p256) target = $region48
        $region47: #{tpu_custom_call.1} parent=39 // pred_region
          %259 = dma.done [#allocation6], 2048
        $region48: #{tpu_custom_call.1} parent=39 // pred_fallthru
          _
        // Predicated region
        $region49: #{tpu_custom_call.1} parent=39 // pred_check
          %p260 = pneg %p87
        $region50: #{tpu_custom_call.1} parent=39 // pred_check_branch
          %262 = sbr.rel (%p260) target = $region52
        $region51: #{tpu_custom_call.1} parent=39 // pred_region
          %263 = dma.done [#allocation6], 16
        $region52: #{tpu_custom_call.1} parent=39 // pred_fallthru
          _
        // Predicated region
        $region53: #{tpu_custom_call.1} parent=39 // pred_check
          %p264 = pneg %p108
        $region54: #{tpu_custom_call.1} parent=39 // pred_check_branch
          %266 = sbr.rel (%p264) target = $region56
        $region55: #{tpu_custom_call.1} parent=39 // pred_region
          %267 = dma.done [#allocation9], 2048
        $region56: #{tpu_custom_call.1} parent=39 // pred_fallthru
          _
        // Predicated region
        $region57: #{tpu_custom_call.1} parent=39 // pred_check
          %p268 = pneg %p129
        $region58: #{tpu_custom_call.1} parent=39 // pred_check_branch
          %270 = sbr.rel (%p268) target = $region60
        $region59: #{tpu_custom_call.1} parent=39 // pred_region
          %271 = dma.done [#allocation9], 16
        $region60: #{tpu_custom_call.1} parent=39 // pred_fallthru
          _
        %s272 = sand.u32 %s32, 1
        %s273 = scalar_lea.sflag [#allocation3], %s272
        %s274 = sand.u32 %s32, 1
        %s275 = smul.addr %s274, 8
        %s276 = scalar_lea.vmem [#allocation2], %s275
        %p277 = pneg %p45
        %p278 = pneg %p42
        %p279 = pneg %p66
        %p280 = pneg %p63
        %p281 = pneg %p87
        %p282 = pneg %p84
        %p283 = pneg %p108
        %p284 = pneg %p105
        %p285 = pneg %p129
        %p286 = pneg %p126
        %p287 = pneg %p155
        %p288 = pneg %p152
        %s289 = sand.u32 %s142, 1
        %s290 = scalar_lea.sflag [#allocation4], %s289
        %s291 = sand.u32 %s142, 1
        %s292 = smul.addr %s291, 8
        %s293 = scalar_lea.vmem [#allocation11], %s292
        %v294 = vld [vmem:[%s251] sm:$0xff]
        %v295 = vld [vmem:[#allocation5] sm:$0xff]
        %v296 = vld [vmem:[#allocation5 + $0x8] sm:$0xff]
        %v297 = vld [vmem:[#allocation5 + $0x10] sm:$0xff]
        %v298 = vld [vmem:[#allocation5 + $0x18] sm:$0xff]
        %v299 = vld [vmem:[#allocation5 + $0x20] sm:$0xff]
        %v300 = vld [vmem:[#allocation5 + $0x28] sm:$0xff]
        %v301 = vld [vmem:[#allocation5 + $0x30] sm:$0xff]
        %v302 = vld [vmem:[#allocation5 + $0x38] sm:$0xff]
        %v303 = vld [vmem:[#allocation5 + $0x40] sm:$0xff]
        %v304 = vld [vmem:[#allocation5 + $0x48] sm:$0xff]
        %v305 = vld [vmem:[#allocation5 + $0x50] sm:$0xff]
        %v306 = vld [vmem:[#allocation5 + $0x58] sm:$0xff]
        %v307 = vld [vmem:[#allocation5 + $0x60] sm:$0xff]
        %v308 = vld [vmem:[#allocation5 + $0x68] sm:$0xff]
        %v309 = vld [vmem:[#allocation5 + $0x70] sm:$0xff]
        %v310 = vld [vmem:[#allocation5 + $0x78] sm:$0xff]
        %v311 = vld [vmem:[#allocation7] sm:$0x1]
        %v313 = vlaneseq
        %v314 = vshrl.u32 %v313, 7
        %v315 = vsub.s32 0, %v314
        %v316 = vrot.slane %v311, %v315
        %318 = vmatprep.subr.mxu0 0.0
        %319 = vmatpush1.msra.mxu0 %v295
        %320 = vmatprep.subr.mxu0 0.0
        %321 = vmatpush1.msra.mxu0 %v296
        %322 = vmatprep.subr.mxu0 0.0
        %323 = vmatpush1.msra.mxu0 %v297
        %324 = vmatprep.subr.mxu0 0.0
        %325 = vmatpush1.msra.mxu0 %v298
        %326 = vmatprep.subr.mxu0 0.0
        %327 = vmatpush1.msra.mxu0 %v299
        %328 = vmatprep.subr.mxu0 0.0
        %329 = vmatpush1.msra.mxu0 %v300
        %330 = vmatprep.subr.mxu0 0.0
        %331 = vmatpush1.msra.mxu0 %v301
        %332 = vmatprep.subr.mxu0 0.0
        %333 = vmatpush1.msra.mxu0 %v302
        %334 = vmatprep.subr.mxu0 0.0
        %335 = vmatpush1.msra.mxu0 %v303
        %336 = vmatprep.subr.mxu0 0.0
        %337 = vmatpush1.msra.mxu0 %v304
        %338 = vmatprep.subr.mxu0 0.0
        %339 = vmatpush1.msra.mxu0 %v305
        %340 = vmatprep.subr.mxu0 0.0
        %341 = vmatpush1.msra.mxu0 %v306
        %342 = vmatprep.subr.mxu0 0.0
        %343 = vmatpush1.msra.mxu0 %v307
        %344 = vmatprep.subr.mxu0 0.0
        %345 = vmatpush1.msra.mxu0 %v308
        %346 = vmatprep.subr.mxu0 0.0
        %347 = vmatpush1.msra.mxu0 %v309
        %348 = vmatprep.subr.mxu0 0.0
        %349 = vmatpush1.msra.mxu0 %v310
        %350 = vmatprep.subr.mxu0 0.0
        %351 = vmatpush1.msra.mxu0 0.0
        %352 = vmatprep.subr.mxu0 0.0
        %353 = vmatpush1.msra.mxu0 0.0
        %354 = vmatprep.subr.mxu0 0.0
        %355 = vmatpush1.msra.mxu0 0.0
        %356 = vmatprep.subr.mxu0 0.0
        %357 = vmatpush1.msra.mxu0 0.0
        %358 = vmatprep.subr.mxu0 0.0
        %359 = vmatpush1.msra.mxu0 0.0
        %360 = vmatprep.subr.mxu0 0.0
        %361 = vmatpush1.msra.mxu0 0.0
        %362 = vmatprep.subr.mxu0 0.0
        %363 = vmatpush1.msra.mxu0 0.0
        %364 = vmatprep.subr.mxu0 0.0
        %365 = vmatpush1.msra.mxu0 0.0
        %366 = vmatprep.subr.mxu0 0.0
        %367 = vmatpush1.msra.mxu0 0.0
        %368 = vmatprep.subr.mxu0 0.0
        %369 = vmatpush1.msra.mxu0 0.0
        %370 = vmatprep.subr.mxu0 0.0
        %371 = vmatpush1.msra.mxu0 0.0
        %372 = vmatprep.subr.mxu0 0.0
        %373 = vmatpush1.msra.mxu0 0.0
        %374 = vmatprep.subr.mxu0 0.0
        %375 = vmatpush1.msra.mxu0 0.0
        %376 = vmatprep.subr.mxu0 0.0
        %377 = vmatpush1.msra.mxu0 0.0
        %378 = vmatprep.subr.mxu0 0.0
        %379 = vmatpush1.msra.mxu0 0.0
        %380 = vmatprep.subr.mxu0 0.0
        %381 = vmatpush1.msra.mxu0 0.0
        %382 = vmatprep.mubr.f32.mxu0 0.0
        %383 = vmatmul.mubr.f32.gmra.mrb[0].mxu0 %v294
        %v384 = vpop.f32.mrb[0].mxu0
        %v385 = vadd.f32 %v316, %v384
        %v386 = vpop.f32.mrb[0].mxu0
        %387 = vdwg.mxu0
        %v388 = vmax.f32 %v385, 0.0
        %v389 = vld [vmem:[#allocation8] sm:$0xff]
        %v390 = vld [vmem:[#allocation8 + $0x8] sm:$0xff]
        %v391 = vld [vmem:[#allocation8 + $0x10] sm:$0xff]
        %v392 = vld [vmem:[#allocation8 + $0x18] sm:$0xff]
        %v393 = vld [vmem:[#allocation8 + $0x20] sm:$0xff]
        %v394 = vld [vmem:[#allocation8 + $0x28] sm:$0xff]
        %v395 = vld [vmem:[#allocation8 + $0x30] sm:$0xff]
        %v396 = vld [vmem:[#allocation8 + $0x38] sm:$0xff]
        %v397 = vld [vmem:[#allocation8 + $0x40] sm:$0xff]
        %v398 = vld [vmem:[#allocation8 + $0x48] sm:$0xff]
        %v399 = vld [vmem:[#allocation8 + $0x50] sm:$0xff]
        %v400 = vld [vmem:[#allocation8 + $0x58] sm:$0xff]
        %v401 = vld [vmem:[#allocation8 + $0x60] sm:$0xff]
        %v402 = vld [vmem:[#allocation8 + $0x68] sm:$0xff]
        %v403 = vld [vmem:[#allocation8 + $0x70] sm:$0xff]
        %v404 = vld [vmem:[#allocation8 + $0x78] sm:$0xff]
        %v405 = vld [vmem:[#allocation10] sm:$0x1]
        %v407 = vlaneseq
        %v408 = vshrl.u32 %v407, 7
        %v409 = vsub.s32 0, %v408
        %v410 = vrot.slane %v405, %v409
        %412 = vmatprep.subr.mxu0 0.0
        %413 = vmatpush1.msra.mxu0 %v389
        %414 = vmatprep.subr.mxu0 0.0
        %415 = vmatpush1.msra.mxu0 %v390
        %416 = vmatprep.subr.mxu0 0.0
        %417 = vmatpush1.msra.mxu0 %v391
        %418 = vmatprep.subr.mxu0 0.0
        %419 = vmatpush1.msra.mxu0 %v392
        %420 = vmatprep.subr.mxu0 0.0
        %421 = vmatpush1.msra.mxu0 %v393
        %422 = vmatprep.subr.mxu0 0.0
        %423 = vmatpush1.msra.mxu0 %v394
        %424 = vmatprep.subr.mxu0 0.0
        %425 = vmatpush1.msra.mxu0 %v395
        %426 = vmatprep.subr.mxu0 0.0
        %427 = vmatpush1.msra.mxu0 %v396
        %428 = vmatprep.subr.mxu0 0.0
        %429 = vmatpush1.msra.mxu0 %v397
        %430 = vmatprep.subr.mxu0 0.0
        %431 = vmatpush1.msra.mxu0 %v398
        %432 = vmatprep.subr.mxu0 0.0
        %433 = vmatpush1.msra.mxu0 %v399
        %434 = vmatprep.subr.mxu0 0.0
        %435 = vmatpush1.msra.mxu0 %v400
        %436 = vmatprep.subr.mxu0 0.0
        %437 = vmatpush1.msra.mxu0 %v401
        %438 = vmatprep.subr.mxu0 0.0
        %439 = vmatpush1.msra.mxu0 %v402
        %440 = vmatprep.subr.mxu0 0.0
        %441 = vmatpush1.msra.mxu0 %v403
        %442 = vmatprep.subr.mxu0 0.0
        %443 = vmatpush1.msra.mxu0 %v404
        %444 = vmatprep.subr.mxu0 0.0
        %445 = vmatpush1.msra.mxu0 0.0
        %446 = vmatprep.subr.mxu0 0.0
        %447 = vmatpush1.msra.mxu0 0.0
        %448 = vmatprep.subr.mxu0 0.0
        %449 = vmatpush1.msra.mxu0 0.0
        %450 = vmatprep.subr.mxu0 0.0
        %451 = vmatpush1.msra.mxu0 0.0
        %452 = vmatprep.subr.mxu0 0.0
        %453 = vmatpush1.msra.mxu0 0.0
        %454 = vmatprep.subr.mxu0 0.0
        %455 = vmatpush1.msra.mxu0 0.0
        %456 = vmatprep.subr.mxu0 0.0
        %457 = vmatpush1.msra.mxu0 0.0
        %458 = vmatprep.subr.mxu0 0.0
        %459 = vmatpush1.msra.mxu0 0.0
        %460 = vmatprep.subr.mxu0 0.0
        %461 = vmatpush1.msra.mxu0 0.0
        %462 = vmatprep.subr.mxu0 0.0
        %463 = vmatpush1.msra.mxu0 0.0
        %464 = vmatprep.subr.mxu0 0.0
        %465 = vmatpush1.msra.mxu0 0.0
        %466 = vmatprep.subr.mxu0 0.0
        %467 = vmatpush1.msra.mxu0 0.0
        %468 = vmatprep.subr.mxu0 0.0
        %469 = vmatpush1.msra.mxu0 0.0
        %470 = vmatprep.subr.mxu0 0.0
        %471 = vmatpush1.msra.mxu0 0.0
        %472 = vmatprep.subr.mxu0 0.0
        %473 = vmatpush1.msra.mxu0 0.0
        %474 = vmatprep.subr.mxu0 0.0
        %475 = vmatpush1.msra.mxu0 0.0
        %476 = vmatprep.mubr.f32.mxu0 0.0
        %477 = vmatmul.mubr.f32.gmra.mrb[0].mxu0 %v388
        %v478 = vpop.f32.mrb[0].mxu0
        %v479 = vadd.f32 %v410, %v478
        %v480 = vpop.f32.mrb[0].mxu0
        %481 = vdwg.mxu0
        %v482 = vadd.f32 %v479, %v294
        %483 = vst [vmem:[%s293] sm:$0xff] %v482
        %s484 = sand.u32 %s142, 1
        %s485 = scalar_lea.sflag [#allocation4], %s484
        %s486 = sand.u32 %s142, 1
        %s487 = smul.addr %s486, 8
        %s488 = scalar_lea.vmem [#allocation11], %s487
        // Predicated region
        $region61: #{tpu_custom_call.1} parent=39 // pred_check
          %p489 = pneg %p152
        $region62: #{tpu_custom_call.1} parent=39 // pred_check_branch
          %491 = sbr.rel (%p489) target = $region64
        $region63: #{tpu_custom_call.1} parent=39 // pred_region
          %s493 = ssub.s32 128, 128
          %494 = vsyncadd %s485, %s493
          %s495 = smul.addr %s24, 128
          %s496 = scalar_lea.hbm %s5, %s495
          %s498 = sshll.u32 %s488, 4
          %s499 = int_to_ptr.vmem [resolvable:$true] %s498
          %501 = dma.vmem_to_hbm [thread:$0]  %s499, 128, %s496, %s485
        $region64: #{tpu_custom_call.1} parent=39 // pred_fallthru
          _
      $region40: #{tpu_custom_call.1} parent=5 // pred_fallthru
        _
      %p502 = scmp.le.s32.totalorder 2, %s19
      // Predicated region
      $region65: #{tpu_custom_call.1} parent=5 // pred_check
        %p503 = pneg %p502
      $region66: #{tpu_custom_call.1} parent=5 // pred_check_branch
        %505 = sbr.rel (%p503) target = $region68
      $region67: #{tpu_custom_call.1} parent=5 // pred_region
        %s506 = ssub.s32 %s19, 2
        // Predicated region
        $region69: #{tpu_custom_call.1} parent=67 // pred_check
          %p507 = pneg %p158
        $region70: #{tpu_custom_call.1} parent=67 // pred_check_branch
          %509 = sbr.rel (%p507) target = $region72
        $region71: #{tpu_custom_call.1} parent=67 // pred_region
          %s510 = sand.u32 %s143, 1
          %s511 = scalar_lea.sflag [#allocation4], %s510
          %s512 = sand.u32 %s143, 1
          %s513 = smul.addr %s512, 8
          %s514 = scalar_lea.vmem [#allocation11], %s513
          %515 = dma.done %s511, 128
        $region72: #{tpu_custom_call.1} parent=67 // pred_fallthru
          _
      $region68: #{tpu_custom_call.1} parent=5 // pred_fallthru
        _
    $region6: #{tpu_custom_call.1} parent=1 // loop_footer
      %s23 = sadd.s32 1, %s19
    $region7: #{tpu_custom_call.1} parent=1 // loop_footer_branch
      %18 = sbr.rel target = $region3
    $region8: #{tpu_custom_call.1} parent=1 // loop_exit
      _
    %516 = vsyncpa [#allocation3], 1
    %s517 = scalar_lea.sflag [#allocation3], 1
    %518 = vsyncpa %s517, 1
    %519 = vsyncpa [#allocation6], 1
    %520 = vsyncpa [#allocation9], 1
    %521 = vsyncpa [#allocation4], 1
    %s522 = scalar_lea.sflag [#allocation4], 1
    %523 = vsyncpa %s522, 1

</llo_original>
